<compile_context>
chip_gen: v7x
topology: tpu7x:2x2x1
jax: 0.10.0
libtpu: 0.0.40
codegen_flags: <defaults>
</compile_context>

<pallas_src>
import math
from functools import partial

import jax
import jax.numpy as jnp
from jax.experimental import pallas as pl
from jax.experimental.pallas import tpu as pltpu


_VMEM_LIMIT = 64 * 1024 * 1024  # raised scoped-VMEM limit (review item)


# ----------------------------------------------------------------------------
# helpers
# ----------------------------------------------------------------------------
def _round_up(x, m):
    return (x + m - 1) // m * m


def _row_tile(m, cap=1024):
    """Sublane-aligned row tile: multiple of 8, as large as VMEM allows."""
    return min(cap, _round_up(m, 8))


# ----------------------------------------------------------------------------
# row-tiled linear kernel (bf16 MXU inputs, f32 accumulation, bf16/f32 out)
# ----------------------------------------------------------------------------
def _linear_kernel(x_ref, w_ref, b_ref, o_ref):
    x = x_ref[...].astype(jnp.bfloat16)
    y = jnp.dot(x, w_ref[...], preferred_element_type=jnp.float32) + b_ref[...]
    o_ref[...] = y.astype(o_ref.dtype)


def linear(x, w, b, out_dtype=jnp.bfloat16):
    """(M, K) @ (K, N) + b, row-tiled with 8-aligned tiles (rows padded)."""
    M, K = x.shape
    N = w.shape[1]
    tm = _row_tile(M)
    Mp = _round_up(M, tm)
    if Mp != M:
        x = jnp.pad(x, ((0, Mp - M), (0, 0)))
    out = pl.pallas_call(
        _linear_kernel,
        grid=(Mp // tm,),
        in_specs=[pl.BlockSpec((tm, K), lambda i: (i, 0)),
                  pl.BlockSpec((K, N), lambda i: (0, 0)),
                  pl.BlockSpec((1, N), lambda i: (0, 0))],
        out_specs=pl.BlockSpec((tm, N), lambda i: (i, 0)),
        out_shape=jax.ShapeDtypeStruct((Mp, N), out_dtype),
        compiler_params=pltpu.CompilerParams(
            dimension_semantics=("parallel",), vmem_limit_bytes=_VMEM_LIMIT),
    )(x, w, b.reshape(1, N))
    return out[:M] if Mp != M else out


# ----------------------------------------------------------------------------
# fused residual-add + LayerNorm (channel axis), row-tiled, f32 stats, bf16 out
# ----------------------------------------------------------------------------
def _add_ln_kernel(x_ref, y_ref, g_ref, b_ref, o_ref, *, eps):
    x = x_ref[...].astype(jnp.float32) + y_ref[...].astype(jnp.float32)
    mean = jnp.mean(x, axis=-1, keepdims=True)
    var = jnp.mean(jnp.square(x - mean), axis=-1, keepdims=True)
    y = (x - mean) * jax.lax.rsqrt(var + eps) * g_ref[...] + b_ref[...]
    o_ref[...] = y.astype(o_ref.dtype)


def add_layer_norm(x_btc, y_btc, gamma, beta, eps=1e-5):
    B, T, C = x_btc.shape
    M = B * T
    tm = _row_tile(M)
    Mp = _round_up(M, tm)
    x2 = x_btc.reshape(M, C)
    y2 = y_btc.reshape(M, C)
    if Mp != M:
        x2 = jnp.pad(x2, ((0, Mp - M), (0, 0)))
        y2 = jnp.pad(y2, ((0, Mp - M), (0, 0)))
    out = pl.pallas_call(
        partial(_add_ln_kernel, eps=eps),
        grid=(Mp // tm,),
        in_specs=[pl.BlockSpec((tm, C), lambda i: (i, 0)),
                  pl.BlockSpec((tm, C), lambda i: (i, 0)),
                  pl.BlockSpec((1, C), lambda i: (0, 0)),
                  pl.BlockSpec((1, C), lambda i: (0, 0))],
        out_specs=pl.BlockSpec((tm, C), lambda i: (i, 0)),
        out_shape=jax.ShapeDtypeStruct((Mp, C), jnp.bfloat16),
        compiler_params=pltpu.CompilerParams(
            dimension_semantics=("parallel",), vmem_limit_bytes=_VMEM_LIMIT),
    )(x2, y2, gamma.reshape(1, C), beta.reshape(1, C))
    out = out[:M] if Mp != M else out
    return out.reshape(B, T, C)


# ----------------------------------------------------------------------------
# attention core: one (batch, head) per grid step; relative-KEY bias fused
# in-kernel (q@rel_k^T + strided-roll skew); probs emitted in bf16 only.
# ----------------------------------------------------------------------------
def _attn_kernel(len_ref, q_ref, k_ref, v_ref, rk_ref, ctx_ref, p_ref):
    b = pl.program_id(0)
    length = len_ref[b]
    T = q_ref.shape[2]

    q = q_ref[0, 0]                       # (T, d) bf16, 1/sqrt(d) folded into wq
    k = k_ref[0, 0]
    v = v_ref[0, 0]

    # content scores: q @ k^T as an NT dot_general (no in-kernel transpose)
    scores = jax.lax.dot_general(
        q, k, (((1,), (1,)), ((), ())), preferred_element_type=jnp.float32)

    # relative-key bias, fully VMEM-resident:
    #   rel[t, r] = q[t] . rel_k[r]           (T, Wk) on the MXU
    #   bias[t, s] = rel[t, s - t + T - 1]    realized as: roll row t left by t
    #                                         (lane rotate, per-sublane stride 1)
    #                                         then take columns [T-1, 2T-1).
    rel = jnp.dot(q, rk_ref[...], preferred_element_type=jnp.float32)
    rolled = pltpu.roll(rel, 0, 1, stride=1, stride_axis=0)
    scores = scores + rolled[:, T - 1:2 * T - 1]

    # 1-D additive column mask (rows >= length are masked downstream, as in VITS)
    col = jax.lax.broadcasted_iota(jnp.int32, (1, T), 1)
    scores = jnp.where(col < length, scores, -1.0e4)

    smax = jnp.max(scores, axis=-1, keepdims=True)
    p = jnp.exp(scores - smax)
    p = p * pl.reciprocal(jnp.sum(p, axis=-1, keepdims=True), approx=True)

    ctx = jnp.dot(p.astype(jnp.bfloat16), v, preferred_element_type=jnp.float32)
    ctx_ref[0, 0] = ctx.astype(ctx_ref.dtype)
    p_ref[0, 0] = p.astype(p_ref.dtype)   # bf16: needed only for the rel-value term


def _get_relative_embeddings(rel_emb, length, window_size):
    """(2*window+1, d) -> (2*length-1, d), zero-padded / sliced (VITS)."""
    pad_length = max(length - (window_size + 1), 0)
    slice_start = max(window_size + 1 - length, 0)
    slice_end = slice_start + 2 * length - 1
    e = rel_emb
    if pad_length > 0:
        e = jnp.pad(e, ((pad_length, pad_length), (0, 0)))
    return e[slice_start:slice_end, :]


def _absolute_to_relative(x):
    # (B, H, T, T) -> (B, H, T, 2T-1)   (pure layout moves, bf16, XLA)
    B, H, T, _ = x.shape
    x = jnp.pad(x, ((0, 0), (0, 0), (0, 0), (0, T - 1)))
    x = x.reshape(B, H, T * (2 * T - 1))
    x = jnp.pad(x, ((0, 0), (0, 0), (T, 0)))
    x = x.reshape(B, H, T, 2 * T)
    return x[:, :, :, 1:]


def multi_head_attention(x_btc, lengths, p, n_heads, window_size):
    B, T, C = x_btc.shape
    d = C // n_heads

    # fused QKV projection (scale folded into the q columns of w_qkv), bf16 out
    qkv = linear(x_btc.reshape(B * T, C), p["w_qkv"], p["b_qkv"])       # (B*T, 3C)
    qkv = qkv.reshape(B, T, 3, n_heads, d)
    qh = jnp.transpose(qkv[:, :, 0], (0, 2, 1, 3))                      # (B, nh, T, d)
    kh = jnp.transpose(qkv[:, :, 1], (0, 2, 1, 3))
    vh = jnp.transpose(qkv[:, :, 2], (0, 2, 1, 3))

    # relative-embedding tables, lane-padded to a multiple of 128 (tiny)
    Wk = _round_up(2 * T - 1, 128)
    rk = _get_relative_embeddings(p["emb_rel_k"], T, window_size)       # (2T-1, d)
    rv = _get_relative_embeddings(p["emb_rel_v"], T, window_size)
    rkT = jnp.transpose(jnp.pad(rk, ((0, Wk - (2 * T - 1)), (0, 0)))
                        ).astype(jnp.bfloat16)                          # (d, Wk)
    rv_pad = jnp.pad(rv, ((0, Wk - (2 * T - 1)), (0, 0))).astype(jnp.bfloat16)

    ctx, probs = pl.pallas_call(
        _attn_kernel,
        grid_spec=pltpu.PrefetchScalarGridSpec(
            num_scalar_prefetch=1,
            grid=(B, n_heads),
            in_specs=[
                pl.BlockSpec((1, 1, T, d), lambda b, h, lens: (b, h, 0, 0)),
                pl.BlockSpec((1, 1, T, d), lambda b, h, lens: (b, h, 0, 0)),
                pl.BlockSpec((1, 1, T, d), lambda b, h, lens: (b, h, 0, 0)),
                pl.BlockSpec((d, Wk), lambda b, h, lens: (0, 0)),
            ],
            out_specs=[
                pl.BlockSpec((1, 1, T, d), lambda b, h, lens: (b, h, 0, 0)),
                pl.BlockSpec((1, 1, T, T), lambda b, h, lens: (b, h, 0, 0)),
            ],
        ),
        out_shape=(jax.ShapeDtypeStruct((B, n_heads, T, d), jnp.bfloat16),
                   jax.ShapeDtypeStruct((B, n_heads, T, T), jnp.bfloat16)),
        compiler_params=pltpu.CompilerParams(
            dimension_semantics=("parallel", "parallel"),
            vmem_limit_bytes=_VMEM_LIMIT),
    )(lengths, qh, kh, vh, rkT)

    # relative-VALUE term: abs->rel shift on bf16 probs (XLA layout moves only),
    # then (B*nh*T, Wk) @ (Wk, d) on the MXU with a lane-dense padded width.
    # TODO(synk): fold this into _attn_kernel too once a negative-stride lane
    # roll is exercised; the kernel already keeps p VMEM-resident.
    p_rel = _absolute_to_relative(probs)                                # (B,nh,T,2T-1)
    p_rel = jnp.pad(p_rel, ((0, 0), (0, 0), (0, 0), (0, Wk - (2 * T - 1))))
    rel_out = linear(p_rel.reshape(B * n_heads * T, Wk), rv_pad,
                     jnp.zeros((d,), jnp.float32)).reshape(B, n_heads, T, d)

    # merge heads and apply the output projection
    attn = ctx + rel_out                                                # bf16
    attn = jnp.transpose(attn, (0, 2, 1, 3)).reshape(B * T, C)
    out = linear(attn, p["wo"], p["bo"])
    return out.reshape(B, T, C)


# ----------------------------------------------------------------------------
# fused FFN: mask -> conv1(k) -> ReLU -> mask -> conv2(k) -> mask, per batch,
# each conv as a single im2col matmul (T, k*Cin) x (k*Cin, Cout)
# ----------------------------------------------------------------------------
def _ffn_kernel(len_ref, x_ref, w1_ref, b1_ref, w2_ref, b2_ref, o_ref, *, ksize):
    b = pl.program_id(0)
    length = len_ref[b]
    T = x_ref.shape[1]
    mask = (jax.lax.broadcasted_iota(jnp.int32, (T, 1), 0) < length
            ).astype(jnp.float32)                                       # (T, 1)
    pad_l, pad_r = (ksize - 1) // 2, ksize // 2

    def conv(h, w_ref_, b_ref_):
        cin = h.shape[1]
        parts = []
        if pad_l:
            parts.append(jnp.zeros((pad_l, cin), h.dtype))
        parts.append(h)
        if pad_r:
            parts.append(jnp.zeros((pad_r, cin), h.dtype))
        hp = jnp.concatenate(parts, axis=0) if len(parts) > 1 else h    # (T+k-1, cin)
        if ksize > 1:
            cols = jnp.concatenate([hp[j:j + T, :] for j in range(ksize)],
                                   axis=1)                              # (T, k*cin)
        else:
            cols = hp
        return jnp.dot(cols, w_ref_[...],
                       preferred_element_type=jnp.float32) + b_ref_[...]

    x = x_ref[0].astype(jnp.float32) * mask
    h = conv(x.astype(jnp.bfloat16), w1_ref, b1_ref)
    h = jnp.maximum(h, 0.0) * mask
    y = conv(h.astype(jnp.bfloat16), w2_ref, b2_ref)
    o_ref[0] = (y * mask).astype(o_ref.dtype)


def ffn_fused(x_btc, lengths, w1, b1, w2, b2, ksize):
    B, T, Cin = x_btc.shape
    Fc = w1.shape[1]
    Cout = w2.shape[1]
    # TODO(synk): add a T-tile grid axis with a (ksize-1)-row halo for very long
    # sequences (v5e scoped-VMEM / v7x dual-TC); full-T blocks are fine here.
    return pl.pallas_call(
        partial(_ffn_kernel, ksize=ksize),
        grid_spec=pltpu.PrefetchScalarGridSpec(
            num_scalar_prefetch=1,
            grid=(B,),
            in_specs=[
                pl.BlockSpec((1, T, Cin), lambda b, lens: (b, 0, 0)),
                pl.BlockSpec((ksize * Cin, Fc), lambda b, lens: (0, 0)),
                pl.BlockSpec((1, Fc), lambda b, lens: (0, 0)),
                pl.BlockSpec((ksize * Fc, Cout), lambda b, lens: (0, 0)),
                pl.BlockSpec((1, Cout), lambda b, lens: (0, 0)),
            ],
            out_specs=pl.BlockSpec((1, T, Cout), lambda b, lens: (b, 0, 0)),
        ),
        out_shape=jax.ShapeDtypeStruct((B, T, Cout), jnp.bfloat16),
        compiler_params=pltpu.CompilerParams(
            dimension_semantics=("parallel",), vmem_limit_bytes=_VMEM_LIMIT),
    )(lengths, x_btc, w1, b1.reshape(1, Fc), w2, b2.reshape(1, Cout))


# ----------------------------------------------------------------------------
# VITS attentions.Encoder (channels-last) + speaker conditioning
# ----------------------------------------------------------------------------
def encoder_forward(x_btc, lengths, g, enc, cfg):
    B, T, H = x_btc.shape
    mask = (jnp.arange(T)[None, :] < lengths[:, None]
            ).astype(x_btc.dtype)[:, :, None]                           # (B, T, 1)
    x = x_btc * mask
    for i, lp in enumerate(enc["layers"]):
        if i == enc["cond_layer_idx"] and g is not None:
            # TODO(synk): exact g-injection point of rvc_v3 attentions.Encoder is
            # not shown; VITS2-style speaker-embedding linear add is assumed.
            g_emb = linear(g[:, :, 0], enc["spk_w"], enc["spk_b"])      # (B, H) bf16
            x = (x + g_emb[:, None, :]) * mask
        y = multi_head_attention(x, lengths, lp["attn"],
                                 cfg["n_heads"], cfg["window_size"])
        x = add_layer_norm(x, y, lp["norm1_g"], lp["norm1_b"])
        y = ffn_fused(x, lengths, lp["ffn_w1"], lp["ffn_b1"],
                      lp["ffn_w2"], lp["ffn_b2"], cfg["kernel_size"])
        x = add_layer_norm(x, y, lp["norm2_g"], lp["norm2_b"])
    return x * mask


# ----------------------------------------------------------------------------
# TextEncoder forward
# ----------------------------------------------------------------------------
def text_encoder_forward(params, phone, pitch, lengths, g, cfg):
    B, T, E = phone.shape
    H, O = cfg["hidden_channels"], cfg["out_channels"]

    # x = emb_phone(phone) [+ emb_pitch(pitch)]   (pitch lookup = gather)
    x = linear(phone.reshape(B * T, E), params["emb_phone_w"], params["emb_phone_b"])
    if pitch is not None:
        x = x + jnp.take(params["emb_pitch"], pitch.reshape(B * T), axis=0)
    x = x.reshape(B, T, H)                                              # bf16

    # x_mask = sequence_mask(lengths, T)[:, None, :]
    x_mask_b1t = (jnp.arange(T)[None, :] < lengths[:, None]
                  ).astype(jnp.float32)[:, None, :]                     # (B, 1, T)

    # encoder(x * x_mask, x_mask, g) -- channels-last, mask applied in-encoder
    x_enc = encoder_forward(x, lengths, g, params["encoder"], cfg)      # (B, T, H)

    # proj: Conv1d(hidden, out, 1); final output back to (B, out, T) in f32
    out = linear(x_enc.reshape(B * T, H), params["proj_w"], params["proj_b"],
                 out_dtype=jnp.float32)
    out = jnp.transpose(out.reshape(B, T, O), (0, 2, 1))
    return out, None, x_mask_b1t


# ----------------------------------------------------------------------------
# Deterministic parameter init (shapes per the module's __init__); matmul
# weights pre-cast to bf16 once, biases / LN stay f32.
# ----------------------------------------------------------------------------
def init_params(key, cfg):
    H, E = cfg["hidden_channels"], cfg["emb_channels"]
    Fc, G, O = cfg["filter_channels"], cfg["gin_channels"], cfg["out_channels"]
    nh, nl, k, w = cfg["n_heads"], cfg["n_layers"], cfg["kernel_size"], cfg["window_size"]
    d = H // nh
    scale = 1.0 / math.sqrt(d)

    keys = iter(jax.random.split(key, 512))

    def nrm(shape, s):
        return s * jax.random.normal(next(keys), shape, jnp.float32)

    def bf(x):
        return x.astype(jnp.bfloat16)

    params = {
        "emb_phone_w": bf(nrm((E, H), E ** -0.5)),
        "emb_phone_b": jnp.zeros((H,), jnp.float32),
        "emb_pitch": bf(nrm((256, H), 0.02)),              # nn.Embedding(256, hidden)
        "proj_w": bf(nrm((H, O), H ** -0.5)),
        "proj_b": jnp.zeros((O,), jnp.float32),
        # NOTE: self.emb_g (Conv1d(gin, hidden, 1)) and self.lrelu exist in
        # __init__ but are unused by the shown forward -> not instantiated.
        "encoder": {
            "cond_layer_idx": 0,
            "spk_w": bf(nrm((G, H), G ** -0.5)),
            "spk_b": jnp.zeros((H,), jnp.float32),
            "layers": [],
        },
    }
    for _ in range(nl):
        # 1/sqrt(d) folded into the q projection (bias is zero so this is exact)
        wq = nrm((H, H), H ** -0.5) * scale
        wk = nrm((H, H), H ** -0.5)
        wv = nrm((H, H), H ** -0.5)
        lp = {
            "attn": {
                "w_qkv": bf(jnp.concatenate([wq, wk, wv], axis=1)),     # (H, 3H)
                "b_qkv": jnp.zeros((3 * H,), jnp.float32),
                "wo": bf(nrm((H, H), H ** -0.5)),
                "bo": jnp.zeros((H,), jnp.float32),
                "emb_rel_k": nrm((2 * w + 1, d), d ** -0.5),
                "emb_rel_v": nrm((2 * w + 1, d), d ** -0.5),
            },
            "norm1_g": jnp.ones((H,), jnp.float32), "norm1_b": jnp.zeros((H,), jnp.float32),
            # conv weights stored directly in im2col layout (k*Cin, Cout)
            #   == torch (Cout, Cin, k).permute(2, 1, 0).reshape(k*Cin, Cout)
            "ffn_w1": bf(nrm((k * H, Fc), (H * k) ** -0.5)), "ffn_b1": jnp.zeros((Fc,), jnp.float32),
            "ffn_w2": bf(nrm((k * Fc, H), (Fc * k) ** -0.5)), "ffn_b2": jnp.zeros((H,), jnp.float32),
            "norm2_g": jnp.ones((H,), jnp.float32), "norm2_b": jnp.zeros((H,), jnp.float32),
        }
        params["encoder"]["layers"].append(lp)
    return params


# ----------------------------------------------------------------------------
if __name__ == "__main__":
    cfg = dict(
        out_channels=16,
        hidden_channels=32,
        filter_channels=64,
        emb_channels=48,
        gin_channels=16,
        n_heads=2,
        n_layers=2,
        kernel_size=3,
        p_dropout=0.0,      # dropout is identity (inference)
        window_size=10,     # VITS attentions.Encoder default
    )
    B, T = 2, 8             # T kept a multiple of 8 (sublane-aligned blocks)

    root = jax.random.PRNGKey(0)
    kp, kph, kpi, kg = jax.random.split(root, 4)

    params = init_params(kp, cfg)
    phone = jax.random.normal(kph, (B, T, cfg["emb_channels"]), jnp.float32)
    pitch = jax.random.randint(kpi, (B, T), 0, 256, jnp.int32)
    lengths = jnp.array([T, T - 3], jnp.int32)
    g = jax.random.normal(kg, (B, cfg["gin_channels"], 1), jnp.float32)

    out, _none, x_mask = text_encoder_forward(params, phone, pitch, lengths, g, cfg)
    jax.block_until_ready(out)
    jax.block_until_ready(x_mask)

    assert out.shape == (B, cfg["out_channels"], T)
    assert x_mask.shape == (B, 1, T)
    print("KERNEL_OK")
</pallas_src>

<mosaic_0001>
module attributes {stable_mosaic.version = 11 : i64} {
  func.func @_linear_kernel(%arg0: i32, %arg1: memref<16x48xf32, #tpu.memory_space<vmem>>, %arg2: memref<48x32xbf16, #tpu.memory_space<vmem>>, %arg3: memref<1x32xf32, #tpu.memory_space<vmem>>, %arg4: memref<16x32xbf16, #tpu.memory_space<vmem>>) attributes {dimension_semantics = [#tpu.dimension_semantics<parallel>], iteration_bounds = array<i64: 1>, scalar_prefetch = 0 : i64, scratch_operands = 0 : i64, tpu.core_type = #tpu.core_type<tc>, window_params = [{transform_indices = @transform_0, window_bounds = array<i64: 16, 48>}, {pipeline_mode = #tpu.pipeline_mode<synchronous>, transform_indices = @transform_1, window_bounds = array<i64: 48, 32>}, {pipeline_mode = #tpu.pipeline_mode<synchronous>, transform_indices = @transform_2, window_bounds = array<i64: 1, 32>}, {transform_indices = @transform_3, window_bounds = array<i64: 16, 32>}]} {
    %c0 = arith.constant 0 : index
    %c0_0 = arith.constant 0 : index
    %0 = vector.load %arg1[%c0, %c0_0] : memref<16x48xf32, #tpu.memory_space<vmem>>, vector<16x48xf32>
    %1 = arith.truncf %0 : vector<16x48xf32> to vector<16x48xbf16>
    %c0_1 = arith.constant 0 : index
    %c0_2 = arith.constant 0 : index
    %2 = vector.load %arg2[%c0_1, %c0_2] : memref<48x32xbf16, #tpu.memory_space<vmem>>, vector<48x32xbf16>
    %cst = arith.constant dense<0.000000e+00> : vector<16x32xf32>
    %3 = tpu.matmul %1, %2, %cst {dimension_numbers = #tpu.dot_dimension_numbers<[1], [0], [0], [1], [0, 0, 1, 1], [], []>} : vector<16x48xbf16>, vector<48x32xbf16>, vector<16x32xf32> -> vector<16x32xf32>
    %c0_3 = arith.constant 0 : index
    %c0_4 = arith.constant 0 : index
    %4 = vector.load %arg3[%c0_3, %c0_4] : memref<1x32xf32, #tpu.memory_space<vmem>>, vector<1x32xf32>
    %5 = vector.broadcast %4 : vector<1x32xf32> to vector<16x32xf32>
    %6 = arith.addf %3, %5 : vector<16x32xf32>
    %7 = arith.truncf %6 : vector<16x32xf32> to vector<16x32xbf16>
    %c0_5 = arith.constant 0 : index
    %c0_6 = arith.constant 0 : index
    %8 = vector.load %arg4[%c0_5, %c0_6] : memref<16x32xbf16, #tpu.memory_space<vmem>>, vector<16x32xbf16>
    tpu.vector_store %arg4[%c0_5, %c0_6], %7 {strides = array<i32>} : memref<16x32xbf16, #tpu.memory_space<vmem>>, vector<16x32xbf16>,
    return
  }
  func.func @transform_0(%arg0: i32) -> (i32, i32) {
    %c0_i32 = arith.constant 0 : i32
    %c0_i32_0 = arith.constant 0 : i32
    return %arg0, %c0_i32 : i32, i32
  }
  func.func @transform_1(%arg0: i32) -> (i32, i32) {
    %c0_i32 = arith.constant 0 : i32
    %c0_i32_0 = arith.constant 0 : i32
    %c0_i32_1 = arith.constant 0 : i32
    return %c0_i32, %c0_i32_0 : i32, i32
  }
  func.func @transform_2(%arg0: i32) -> (i32, i32) {
    %c0_i32 = arith.constant 0 : i32
    %c0_i32_0 = arith.constant 0 : i32
    %c0_i32_1 = arith.constant 0 : i32
    return %c0_i32, %c0_i32_0 : i32, i32
  }
  func.func @transform_3(%arg0: i32) -> (i32, i32) {
    %c0_i32 = arith.constant 0 : i32
    %c0_i32_0 = arith.constant 0 : i32
    return %arg0, %c0_i32 : i32, i32
  }
}

</mosaic_0001>

<llo_original>
// kernel: tpu_custom_call.1
$region0: #{tpu_custom_call.1}
  #allocation0 [shape = 'u32[]', space=smem, size = 0x4, offset = 0x4, fixed_abs, tag = 'smem constant byte address 0x4 - core index']
  #allocation1 [shape = 'u32[144,128]{1,0:T(1,128)}', space=vmem, size = 0x12000, scoped, tag = 'internal scratch']
  %s0 = inlined_call_operand.hbm [shape: f32[16,48], index: 0, kind: input, shape index: {}]
  %s1 = inlined_call_operand.hbm [shape: bf16[48,32], index: 1, kind: input, shape index: {}]
  %s2 = inlined_call_operand.hbm [shape: f32[1,32], index: 2, kind: input, shape index: {}]
  %s3 = inlined_call_operand.hbm [shape: bf16[16,32], index: 3, kind: output, shape index: {}]
  %s4 = sld [smem:[#allocation0]]
  $region34: #{tpu_custom_call.1} parent=0
    _
  %s6 = ssub.s32 1, %s4
  %s7 = scalar_select 0, %s6, %s4
  $region1: #{tpu_custom_call.1} parent=0
    #allocation2 [shape = 'u8[8192]{0}', space=vmem, size = 0x2000, scoped, tag = 'input window, operand 0, single buffered']
    #allocation3 [shape = 's32[1]{0}', space=sflag, size = 0x4, scoped, tag = 'scoped memory for tpu_custom_call.1']
    #allocation4 [shape = 's32[1]{0}', space=sflag, size = 0x4, scoped, tag = 'scoped memory for tpu_custom_call.1']
    #allocation5 [shape = 'u8[12288]{0}', space=vmem, size = 0x3000, scoped, tag = 'input window, operand 1, single buffered']
    #allocation6 [shape = 's32[1]{0}', space=sflag, size = 0x4, scoped, tag = 'scoped memory for tpu_custom_call.1']
    #allocation7 [shape = 'u8[512]{0}', space=vmem, size = 0x400, scoped, tag = 'input window, operand 2, single buffered']
    #allocation8 [shape = 'u8[4096]{0}', space=vmem, size = 0x1000, scoped, tag = 'output window, operand 0, single buffered']
    %8 = vsyncpa [#allocation3], 0
    %9 = vsyncpa [#allocation6], 0
    %10 = vsyncpa [#allocation4], 0
    // Predicated region
    $region2: #{tpu_custom_call.1} parent=1 // pred_check
      _
    $region3: #{tpu_custom_call.1} parent=1 // pred_check_branch
      %12 = sbr.rel (0) target = $region5
    $region4: #{tpu_custom_call.1} parent=1 // pred_region
      %s14 = ssub.s32 256, 256
      %15 = vsyncadd [#allocation3], %s14
      %s16 = sshll.u32 [#allocation2], 4
      %s17 = int_to_ptr.vmem [resolvable:$true] %s16
      %22 = dma.hbm_to_vmem [thread:$0]  %s0, 256, %s17, [#allocation3], 128, 128, 8
    $region5: #{tpu_custom_call.1} parent=1 // pred_fallthru
      _
    // Predicated region
    $region6: #{tpu_custom_call.1} parent=1 // pred_check
      _
    $region7: #{tpu_custom_call.1} parent=1 // pred_check_branch
      %24 = sbr.rel (0) target = $region9
    $region8: #{tpu_custom_call.1} parent=1 // pred_region
      %s26 = ssub.s32 384, 384
      %27 = vsyncadd [#allocation6], %s26
      %s28 = sshll.u32 [#allocation5], 4
      %s29 = int_to_ptr.vmem [resolvable:$true] %s28
      %34 = dma.hbm_to_vmem [thread:$0]  %s1, 384, %s29, [#allocation6], 64, 64, 4
    $region9: #{tpu_custom_call.1} parent=1 // pred_fallthru
      _
    // Predicated region
    $region10: #{tpu_custom_call.1} parent=1 // pred_check
      _
    $region11: #{tpu_custom_call.1} parent=1 // pred_check_branch
      %36 = sbr.rel (0) target = $region13
    $region12: #{tpu_custom_call.1} parent=1 // pred_region
      %s38 = ssub.s32 16, 16
      %39 = vsyncadd [#allocation6], %s38
      %s41 = sshll.u32 [#allocation7], 4
      %s42 = int_to_ptr.vmem [resolvable:$true] %s41
      %44 = dma.hbm_to_vmem [thread:$0]  %s2, 16, %s42, [#allocation6]
    $region13: #{tpu_custom_call.1} parent=1 // pred_fallthru
      _
    // Predicated region
    $region14: #{tpu_custom_call.1} parent=1 // pred_check
      _
    $region15: #{tpu_custom_call.1} parent=1 // pred_check_branch
      %46 = sbr.rel (0) target = $region17
    $region16: #{tpu_custom_call.1} parent=1 // pred_region
      %47 = dma.done [#allocation3], 256
    $region17: #{tpu_custom_call.1} parent=1 // pred_fallthru
      _
    // Predicated region
    $region18: #{tpu_custom_call.1} parent=1 // pred_check
      _
    $region19: #{tpu_custom_call.1} parent=1 // pred_check_branch
      %49 = sbr.rel (0) target = $region21
    $region20: #{tpu_custom_call.1} parent=1 // pred_region
      %50 = dma.done [#allocation6], 384
    $region21: #{tpu_custom_call.1} parent=1 // pred_fallthru
      _
    // Predicated region
    $region22: #{tpu_custom_call.1} parent=1 // pred_check
      _
    $region23: #{tpu_custom_call.1} parent=1 // pred_check_branch
      %52 = sbr.rel (0) target = $region25
    $region24: #{tpu_custom_call.1} parent=1 // pred_region
      %53 = dma.done [#allocation6], 16
    $region25: #{tpu_custom_call.1} parent=1 // pred_fallthru
      _
    %v55 = vld [vmem:[#allocation2] sm:$0xff]
    %v56 = vld [vmem:[#allocation2 + $0x8] sm:$0xff]
    %v57 = vpack.c.bf16 %v56, %v55
    %v58 = vld [vmem:[#allocation5] sm:$0xf]
    %v59 = vld [vmem:[#allocation5 + $0x4] sm:$0xf]
    %v60 = vld [vmem:[#allocation5 + $0x8] sm:$0xf]
    %v61 = vld [vmem:[#allocation5 + $0xc] sm:$0xf]
    %v62 = vld [vmem:[#allocation5 + $0x10] sm:$0xf]
    %v63 = vld [vmem:[#allocation5 + $0x14] sm:$0xf]
    %v64 = vld [vmem:[#allocation7] sm:$0x1]
    %v66 = vlaneseq
    %v67 = vshrl.u32 %v66, 7
    %v68 = vsub.s32 0, %v67
    %v69 = vrot.slane %v64, %v68
    %v77 = vunpack.c.l.b16 %v58
    %v78 = vunpack.c.l.b16 %v59
    %v79 = vunpack.c.l.b16 %v60
    %v80 = vunpack.c.l.b16 %v61
    %v81 = vunpack.c.l.b16 %v62
    %v82 = vunpack.c.l.b16 %v63
    %v83 = vpack.c.b16 %v78, %v77
    %v84 = vpack.c.b16 %v80, %v79
    %v85 = vpack.c.b16 %v82, %v81
    %vm89 = vcmask 392192
    %v91 = vsel %vm89, %v57, 0
    %93 = vmatprep.subr.bf16.mxu0 0
    %94 = vmatpush1.bf16.msra.mxu0 %v83
    %95 = vmatprep.subr.bf16.mxu0 0
    %96 = vmatpush1.bf16.msra.mxu0 %v84
    %97 = vmatprep.subr.bf16.mxu0 0
    %98 = vmatpush1.bf16.msra.mxu0 %v85
    %99 = vmatprep.subr.bf16.mxu0 0
    %100 = vmatpush1.bf16.msra.mxu0 0
    %101 = vmatprep.subr.bf16.mxu0 0
    %102 = vmatpush1.bf16.msra.mxu0 0
    %103 = vmatprep.subr.bf16.mxu0 0
    %104 = vmatpush1.bf16.msra.mxu0 0
    %105 = vmatprep.subr.bf16.mxu0 0
    %106 = vmatpush1.bf16.msra.mxu0 0
    %107 = vmatprep.subr.bf16.mxu0 0
    %108 = vmatpush1.bf16.msra.mxu0 0
    %109 = vmatprep.subr.bf16.mxu0 0
    %110 = vmatpush1.bf16.msra.mxu0 0
    %111 = vmatprep.subr.bf16.mxu0 0
    %112 = vmatpush1.bf16.msra.mxu0 0
    %113 = vmatprep.subr.bf16.mxu0 0
    %114 = vmatpush1.bf16.msra.mxu0 0
    %115 = vmatprep.subr.bf16.mxu0 0
    %116 = vmatpush1.bf16.msra.mxu0 0
    %117 = vmatprep.subr.bf16.mxu0 0
    %118 = vmatpush1.bf16.msra.mxu0 0
    %119 = vmatprep.subr.bf16.mxu0 0
    %120 = vmatpush1.bf16.msra.mxu0 0
    %121 = vmatprep.subr.bf16.mxu0 0
    %122 = vmatpush1.bf16.msra.mxu0 0
    %123 = vmatprep.subr.bf16.mxu0 0
    %124 = vmatpush1.bf16.msra.mxu0 0
    %125 = vmatprep.mubr.bf16.mxu0 0
    %126 = vmatmul.mubr.bf16.gmra.mrb[0].mxu0 %v91
    %v127 = vpop.f32.mrb[0].mxu0
    %v128 = vadd.f32 %v69, %v127
    %v129 = vpop.f32.mrb[0].mxu0
    %v130 = vpop.f32.mrb[0].mxu0
    %v131 = vadd.f32 %v69, %v130
    %v132 = vpop.f32.mrb[0].mxu0
    %133 = vdwg.mxu0
    %v134 = vpack.c.bf16 %v131, %v128
    %v136 = vunpack.c.l.b16 %v134
    %v137 = vunpack.c.h.b16 %v134
    %v138 = vpack.c.b16 %v136, %v136
    %v139 = vpack.c.b16 %v137, %v137
    %vm142 = vcmask 257024
    %143 = vst.msk [vmem:[#allocation8] sm:$0xf] %vm142, %v138
    %144 = vst.msk [vmem:[#allocation8 + $0x4] sm:$0xf] %vm142, %v139
    // Predicated region
    $region26: #{tpu_custom_call.1} parent=1 // pred_check
      _
    $region27: #{tpu_custom_call.1} parent=1 // pred_check_branch
      %146 = sbr.rel (0) target = $region29
    $region28: #{tpu_custom_call.1} parent=1 // pred_region
      %s148 = ssub.s32 128, 128
      %149 = vsyncadd [#allocation4], %s148
      %s150 = sshll.u32 [#allocation8], 4
      %s151 = int_to_ptr.vmem [resolvable:$true] %s150
      %156 = dma.vmem_to_hbm [thread:$0]  %s151, 128, %s3, [#allocation4], 64, 64, 4
    $region29: #{tpu_custom_call.1} parent=1 // pred_fallthru
      _
    // Predicated region
    $region30: #{tpu_custom_call.1} parent=1 // pred_check
      _
    $region31: #{tpu_custom_call.1} parent=1 // pred_check_branch
      %158 = sbr.rel (0) target = $region33
    $region32: #{tpu_custom_call.1} parent=1 // pred_region
      %159 = dma.done [#allocation4], 128
    $region33: #{tpu_custom_call.1} parent=1 // pred_fallthru
      _
    %160 = vsyncpa [#allocation3], 1
    %161 = vsyncpa [#allocation6], 1
    %162 = vsyncpa [#allocation4], 1

</llo_original>
